<compile_context>
chip_gen: v7x
topology: tpu7x:2x2x1
jax: 0.10.0
libtpu: 0.0.40
codegen_flags: <defaults>
</compile_context>

<pallas_src>
import functools
import math

import jax
import jax.numpy as jnp
from jax.experimental import pallas as pl
from jax.experimental.pallas import tpu as pltpu

_LANE = 128            # lane width
_GROUP_ROWS = 8        # sublanes per vreg -> one "group" = 8*128 = 1024 elements
_TARGET_GROUPS = 1024  # groups per block: 1024 * 4 KiB = 4 MiB f32 logits per step
_CHUNK_GROUPS = 64     # compute chunk: 64 groups = 256 KiB f32 temporaries
_MAX_BT = 128          # cap on samples per block (keeps the output block small)


def _cdiv(a, b):
    return -(-a // b)


def _round_up(a, b):
    return _cdiv(a, b) * b


def _bce_dice_partial_kernel(x_ref, t_ref, out_ref, *, bt, groups_per_tile):
    """Accumulate per-sample partials into a lane-dense (4, bt, 8, 128) block.

    out_ref[0] = sum of elementwise BCE-with-logits terms
    out_ref[1] = sum of sigmoid(x) * t   (intersection)
    out_ref[2] = sum of sigmoid(x)       (psum)
    out_ref[3] = sum of t                (tsum)
    Partials are kept per (sublane, lane) slot; the final cross-sublane/lane
    reduce happens in the tiny JAX epilogue.
    """
    j = pl.program_id(2)

    @pl.when(j == 0)
    def _init():
        out_ref[...] = jnp.zeros_like(out_ref)

    # Chunk the (samples, groups) space so per-chunk elementwise temporaries
    # stay ~256 KiB while the DMA block itself can be several MiB.
    if groups_per_tile >= _CHUNK_GROUPS:
        sb, cg = 1, _CHUNK_GROUPS
    else:
        cg = groups_per_tile
        sb = max(1, _CHUNK_GROUPS // cg)

    for b0 in range(0, bt, sb):
        bsz = min(sb, bt - b0)
        for c0 in range(0, groups_per_tile, cg):
            gsz = min(cg, groups_per_tile - c0)
            x = x_ref[b0:b0 + bsz, c0:c0 + gsz, :, :].astype(jnp.float32)
            t = t_ref[b0:b0 + bsz, c0:c0 + gsz, :, :].astype(jnp.float32)

            # Shared transcendental: e = exp(-|x|) feeds both the numerically
            # stable BCE-with-logits term and the sigmoid.
            e = jnp.exp(-jnp.abs(x))
            bce = jnp.maximum(x, 0.0) - x * t + jnp.log(1.0 + e)
            # TODO(synk): on VALU-bound v7x, pl.reciprocal(1+e, approx=True)
            # moves this divide to the EUP (needs a looser dice tolerance).
            inv = 1.0 / (1.0 + e)
            p = jnp.where(x >= 0.0, inv, e * inv)        # == sigmoid(x)

            # Reduce over the group axis only: whole-vreg VALU adds, no XLU.
            out_ref[0, b0:b0 + bsz, :, :] += jnp.sum(bce, axis=1)
            out_ref[1, b0:b0 + bsz, :, :] += jnp.sum(p * t, axis=1)
            out_ref[2, b0:b0 + bsz, :, :] += jnp.sum(p, axis=1)
            out_ref[3, b0:b0 + bsz, :, :] += jnp.sum(t, axis=1)


@jax.jit
def bce_dice_loss(logits, target):
    """logits, target: (N, C, H, W) as in PyTorch.  Returns a scalar loss."""
    n = logits.shape[0]
    d = 1
    for s in logits.shape[1:]:
        d *= s

    group = _GROUP_ROWS * _LANE               # 1024 elements
    g = _cdiv(d, group)                       # vreg-groups per sample

    if g > _TARGET_GROUPS // 2:
        # Large samples: one sample per block, stream row-tiles over axis j.
        bt = 1
        n_tiles = _cdiv(g, _TARGET_GROUPS)
        groups_per_tile = _cdiv(g, n_tiles)
    else:
        # Small samples: batch several samples per block, single row-tile.
        bt = max(1, min(n, _MAX_BT, _TARGET_GROUPS // g))
        n_tiles = 1
        groups_per_tile = g

    g_pad = groups_per_tile * n_tiles
    d_pad = g_pad * group
    n_pad = _round_up(n, bt)

    # Keep both v7x TensorCores busy for small/odd batch sizes by splitting the
    # per-sample reduction range across a second "parallel" grid axis.
    split = 2 if (bt == 1 and n_tiles >= 2 and n_tiles % 2 == 0) else 1
    tiles_per_split = n_tiles // split

    x2 = logits.reshape(n, d)
    t2 = target.reshape(n, d)                 # native dtype, no convert/copy
    if d_pad != d or n_pad != n:
        # Rare with LANE=128.  Padded elements are exact zeros; their exact
        # contribution (log(2) per element to the BCE sum, 0.5 to psum) is
        # subtracted in the epilogue, so the kernel needs no masking.
        x2 = jnp.pad(x2, ((0, n_pad - n), (0, d_pad - d)))
        t2 = jnp.pad(t2, ((0, n_pad - n), (0, d_pad - d)))
    x4 = x2.reshape(n_pad, g_pad, _GROUP_ROWS, _LANE)
    t4 = t2.reshape(n_pad, g_pad, _GROUP_ROWS, _LANE)

    kernel = functools.partial(_bce_dice_partial_kernel,
                               bt=bt, groups_per_tile=groups_per_tile)

    in_block = pl.BlockSpec(
        (bt, groups_per_tile, _GROUP_ROWS, _LANE),
        lambda i, s, j: (i, s * tiles_per_split + j, 0, 0))
    out_block = pl.BlockSpec(
        (4, bt, _GROUP_ROWS, _LANE),
        lambda i, s, j: (0, i * split + s, 0, 0))

    parts = pl.pallas_call(
        kernel,
        out_shape=jax.ShapeDtypeStruct(
            (4, n_pad * split, _GROUP_ROWS, _LANE), jnp.float32),
        grid_spec=pltpu.PrefetchScalarGridSpec(
            num_scalar_prefetch=0,
            grid=(n_pad // bt, split, tiles_per_split),
            in_specs=[in_block, in_block],
            out_specs=out_block,
        ),
        compiler_params=pltpu.CompilerParams(
            dimension_semantics=("parallel", "parallel", "arbitrary"),
            vmem_limit_bytes=32 * 1024 * 1024),
    )(x4, t4)

    # Tiny O(N) epilogue: final cross-sublane/lane reduce + dice/bce combine.
    parts = parts.reshape(4, n_pad, split, _GROUP_ROWS, _LANE)[:, :n]
    parts = jnp.sum(parts, axis=(2, 3, 4))    # (4, n) f32

    pad_elems = jnp.float32(d_pad - d)        # exact-zero padding correction
    bce_sum = parts[0] - pad_elems * jnp.float32(math.log(2.0))
    inter = parts[1]
    psum = parts[2] - 0.5 * pad_elems
    tsum = parts[3]

    bce = jnp.sum(bce_sum) / jnp.float32(n * d)
    smooth = jnp.float32(1e-05)
    dice = (2.0 * inter + smooth) / (psum + tsum + smooth)
    dice_loss = 1.0 - jnp.sum(dice) / jnp.float32(n)
    return 0.5 * bce + dice_loss


def _reference(logits, target):
    # Pure-JAX reference mirroring the PyTorch module.
    x = logits.astype(jnp.float32)
    t = target.astype(jnp.float32)
    bce = jnp.mean(jnp.maximum(x, 0.0) - x * t + jnp.log1p(jnp.exp(-jnp.abs(x))))
    p = jax.nn.sigmoid(x)
    n = x.shape[0]
    p = p.reshape(n, -1)
    t = t.reshape(n, -1)
    smooth = 1e-05
    inter = jnp.sum(p * t, axis=1)
    dice = (2.0 * inter + smooth) / (jnp.sum(p, axis=1) + jnp.sum(t, axis=1) + smooth)
    dice = 1.0 - jnp.sum(dice) / n
    return 0.5 * bce + dice


if __name__ == "__main__":
    key = jax.random.PRNGKey(0)
    k1, k2 = jax.random.split(key)

    # Small shapes consistent with a segmentation loss: (N, C, H, W)
    N, C, H, W = 2, 4, 16, 16
    logits = jax.random.normal(k1, (N, C, H, W), dtype=jnp.float32)
    target = (jax.random.uniform(k2, (N, C, H, W)) > 0.5).astype(jnp.float32)

    loss = bce_dice_loss(logits, target)
    loss = jax.block_until_ready(loss)

    ref = _reference(logits, target)
    assert jnp.allclose(loss, ref, atol=1e-5, rtol=1e-5), (loss, ref)

    print("KERNEL_OK")
</pallas_src>

<mosaic_0001>
module attributes {stable_mosaic.version = 11 : i64} {
  func.func @_bce_dice_partial_kernel(%arg0: i32, %arg1: i32, %arg2: i32, %arg3: memref<2x1x8x128xf32, #tpu.memory_space<vmem>>, %arg4: memref<2x1x8x128xf32, #tpu.memory_space<vmem>>, %arg5: memref<4x2x8x128xf32, #tpu.memory_space<vmem>>) attributes {dimension_semantics = [#tpu.dimension_semantics<parallel>, #tpu.dimension_semantics<parallel>, #tpu.dimension_semantics<arbitrary>], iteration_bounds = array<i64: 1, 1, 1>, scalar_prefetch = 0 : i64, scratch_operands = 0 : i64, tpu.core_type = #tpu.core_type<tc>, window_params = [{transform_indices = @transform_0, window_bounds = array<i64: 2, 1, 8, 128>}, {transform_indices = @transform_1, window_bounds = array<i64: 2, 1, 8, 128>}, {transform_indices = @transform_2, window_bounds = array<i64: 4, 2, 8, 128>}]} {
    %c0_i32 = arith.constant 0 : i32
    %0 = arith.cmpi eq, %arg2, %c0_i32 : i32
    %1 = arith.extui %0 : i1 to i32
    %c0_i32_0 = arith.constant 0 : i32
    %2 = arith.cmpi ne, %1, %c0_i32_0 : i32
    scf.if %2 {
      %cst_46 = arith.constant 0.000000e+00 : f32
      %54 = vector.broadcast %cst_46 : f32 to vector<4x2x8x128xf32>
      %c0_47 = arith.constant 0 : index
      %c0_48 = arith.constant 0 : index
      %c0_49 = arith.constant 0 : index
      %c0_50 = arith.constant 0 : index
      %55 = vector.load %arg5[%c0_47, %c0_48, %c0_49, %c0_50] : memref<4x2x8x128xf32, #tpu.memory_space<vmem>>, vector<4x2x8x128xf32>
      tpu.vector_store %arg5[%c0_47, %c0_48, %c0_49, %c0_50], %54 {strides = array<i32>} : memref<4x2x8x128xf32, #tpu.memory_space<vmem>>, vector<4x2x8x128xf32>,
    } else {
    }
    %c0 = arith.constant 0 : index
    %c0_1 = arith.constant 0 : index
    %c0_2 = arith.constant 0 : index
    %c0_3 = arith.constant 0 : index
    %3 = vector.load %arg3[%c0, %c0_1, %c0_2, %c0_3] : memref<2x1x8x128xf32, #tpu.memory_space<vmem>>, vector<2x1x8x128xf32>
    %c0_4 = arith.constant 0 : index
    %c0_5 = arith.constant 0 : index
    %c0_6 = arith.constant 0 : index
    %c0_7 = arith.constant 0 : index
    %4 = vector.load %arg4[%c0_4, %c0_5, %c0_6, %c0_7] : memref<2x1x8x128xf32, #tpu.memory_space<vmem>>, vector<2x1x8x128xf32>
    %5 = math.absf %3 : vector<2x1x8x128xf32>
    %cst = arith.constant 0.000000e+00 : f32
    %6 = vector.broadcast %cst : f32 to vector<2x1x8x128xf32>
    %7 = arith.subf %6, %5 : vector<2x1x8x128xf32>
    %8 = math.exp %7 : vector<2x1x8x128xf32>
    %cst_8 = arith.constant 0.000000e+00 : f32
    %9 = vector.broadcast %cst_8 : f32 to vector<2x1x8x128xf32>
    %10 = arith.maximumf %3, %9 : vector<2x1x8x128xf32>
    %11 = arith.mulf %3, %4 : vector<2x1x8x128xf32>
    %12 = arith.subf %10, %11 : vector<2x1x8x128xf32>
    %cst_9 = arith.constant 1.000000e+00 : f32
    %13 = vector.broadcast %cst_9 : f32 to vector<2x1x8x128xf32>
    %14 = arith.addf %13, %8 : vector<2x1x8x128xf32>
    %15 = math.log %14 : vector<2x1x8x128xf32>
    %16 = arith.addf %12, %15 : vector<2x1x8x128xf32>
    %cst_10 = arith.constant 1.000000e+00 : f32
    %17 = vector.broadcast %cst_10 : f32 to vector<2x1x8x128xf32>
    %18 = arith.addf %17, %8 : vector<2x1x8x128xf32>
    %cst_11 = arith.constant 1.000000e+00 : f32
    %19 = vector.broadcast %cst_11 : f32 to vector<2x1x8x128xf32>
    %20 = arith.divf %19, %18 : vector<2x1x8x128xf32>
    %cst_12 = arith.constant 0.000000e+00 : f32
    %21 = vector.broadcast %cst_12 : f32 to vector<2x1x8x128xf32>
    %22 = arith.cmpf oge, %3, %21 : vector<2x1x8x128xf32>
    %23 = arith.mulf %8, %20 : vector<2x1x8x128xf32>
    %24 = arith.select %22, %20, %23 : vector<2x1x8x128xi1>, vector<2x1x8x128xf32>
    %c0_13 = arith.constant 0 : index
    %c0_14 = arith.constant 0 : index
    %c0_15 = arith.constant 0 : index
    %c0_16 = arith.constant 0 : index
    %25 = vector.load %arg5[%c0_13, %c0_14, %c0_15, %c0_16] : memref<4x2x8x128xf32, #tpu.memory_space<vmem>>, vector<1x2x8x128xf32>
    %26 = vector.shape_cast %25 : vector<1x2x8x128xf32> to vector<2x8x128xf32>
    %cst_17 = arith.constant dense<0.000000e+00> : vector<2x8x128xf32>
    %27 = vector.multi_reduction <add>, %16, %cst_17 [1] : vector<2x1x8x128xf32> to vector<2x8x128xf32>
    %28 = arith.addf %26, %27 : vector<2x8x128xf32>
    %c0_18 = arith.constant 0 : index
    %c0_19 = arith.constant 0 : index
    %c0_20 = arith.constant 0 : index
    %c0_21 = arith.constant 0 : index
    %29 = vector.load %arg5[%c0_18, %c0_19, %c0_20, %c0_21] : memref<4x2x8x128xf32, #tpu.memory_space<vmem>>, vector<1x2x8x128xf32>
    %30 = vector.shape_cast %29 : vector<1x2x8x128xf32> to vector<2x8x128xf32>
    %31 = vector.shape_cast %28 : vector<2x8x128xf32> to vector<1x2x8x128xf32>
    tpu.vector_store %arg5[%c0_18, %c0_19, %c0_20, %c0_21], %31 {strides = array<i32>} : memref<4x2x8x128xf32, #tpu.memory_space<vmem>>, vector<1x2x8x128xf32>,
    %c1 = arith.constant 1 : index
    %c0_22 = arith.constant 0 : index
    %c0_23 = arith.constant 0 : index
    %c0_24 = arith.constant 0 : index
    %32 = vector.load %arg5[%c1, %c0_22, %c0_23, %c0_24] : memref<4x2x8x128xf32, #tpu.memory_space<vmem>>, vector<1x2x8x128xf32>
    %33 = vector.shape_cast %32 : vector<1x2x8x128xf32> to vector<2x8x128xf32>
    %34 = arith.mulf %24, %4 : vector<2x1x8x128xf32>
    %cst_25 = arith.constant dense<0.000000e+00> : vector<2x8x128xf32>
    %35 = vector.multi_reduction <add>, %34, %cst_25 [1] : vector<2x1x8x128xf32> to vector<2x8x128xf32>
    %36 = arith.addf %33, %35 : vector<2x8x128xf32>
    %c1_26 = arith.constant 1 : index
    %c0_27 = arith.constant 0 : index
    %c0_28 = arith.constant 0 : index
    %c0_29 = arith.constant 0 : index
    %37 = vector.load %arg5[%c1_26, %c0_27, %c0_28, %c0_29] : memref<4x2x8x128xf32, #tpu.memory_space<vmem>>, vector<1x2x8x128xf32>
    %38 = vector.shape_cast %37 : vector<1x2x8x128xf32> to vector<2x8x128xf32>
    %39 = vector.shape_cast %36 : vector<2x8x128xf32> to vector<1x2x8x128xf32>
    tpu.vector_store %arg5[%c1_26, %c0_27, %c0_28, %c0_29], %39 {strides = array<i32>} : memref<4x2x8x128xf32, #tpu.memory_space<vmem>>, vector<1x2x8x128xf32>,
    %c2 = arith.constant 2 : index
    %c0_30 = arith.constant 0 : index
    %c0_31 = arith.constant 0 : index
    %c0_32 = arith.constant 0 : index
    %40 = vector.load %arg5[%c2, %c0_30, %c0_31, %c0_32] : memref<4x2x8x128xf32, #tpu.memory_space<vmem>>, vector<1x2x8x128xf32>
    %41 = vector.shape_cast %40 : vector<1x2x8x128xf32> to vector<2x8x128xf32>
    %cst_33 = arith.constant dense<0.000000e+00> : vector<2x8x128xf32>
    %42 = vector.multi_reduction <add>, %24, %cst_33 [1] : vector<2x1x8x128xf32> to vector<2x8x128xf32>
    %43 = arith.addf %41, %42 : vector<2x8x128xf32>
    %c2_34 = arith.constant 2 : index
    %c0_35 = arith.constant 0 : index
    %c0_36 = arith.constant 0 : index
    %c0_37 = arith.constant 0 : index
    %44 = vector.load %arg5[%c2_34, %c0_35, %c0_36, %c0_37] : memref<4x2x8x128xf32, #tpu.memory_space<vmem>>, vector<1x2x8x128xf32>
    %45 = vector.shape_cast %44 : vector<1x2x8x128xf32> to vector<2x8x128xf32>
    %46 = vector.shape_cast %43 : vector<2x8x128xf32> to vector<1x2x8x128xf32>
    tpu.vector_store %arg5[%c2_34, %c0_35, %c0_36, %c0_37], %46 {strides = array<i32>} : memref<4x2x8x128xf32, #tpu.memory_space<vmem>>, vector<1x2x8x128xf32>,
    %c3 = arith.constant 3 : index
    %c0_38 = arith.constant 0 : index
    %c0_39 = arith.constant 0 : index
    %c0_40 = arith.constant 0 : index
    %47 = vector.load %arg5[%c3, %c0_38, %c0_39, %c0_40] : memref<4x2x8x128xf32, #tpu.memory_space<vmem>>, vector<1x2x8x128xf32>
    %48 = vector.shape_cast %47 : vector<1x2x8x128xf32> to vector<2x8x128xf32>
    %cst_41 = arith.constant dense<0.000000e+00> : vector<2x8x128xf32>
    %49 = vector.multi_reduction <add>, %4, %cst_41 [1] : vector<2x1x8x128xf32> to vector<2x8x128xf32>
    %50 = arith.addf %48, %49 : vector<2x8x128xf32>
    %c3_42 = arith.constant 3 : index
    %c0_43 = arith.constant 0 : index
    %c0_44 = arith.constant 0 : index
    %c0_45 = arith.constant 0 : index
    %51 = vector.load %arg5[%c3_42, %c0_43, %c0_44, %c0_45] : memref<4x2x8x128xf32, #tpu.memory_space<vmem>>, vector<1x2x8x128xf32>
    %52 = vector.shape_cast %51 : vector<1x2x8x128xf32> to vector<2x8x128xf32>
    %53 = vector.shape_cast %50 : vector<2x8x128xf32> to vector<1x2x8x128xf32>
    tpu.vector_store %arg5[%c3_42, %c0_43, %c0_44, %c0_45], %53 {strides = array<i32>} : memref<4x2x8x128xf32, #tpu.memory_space<vmem>>, vector<1x2x8x128xf32>,
    return
  }
  func.func @transform_0(%arg0: i32, %arg1: i32, %arg2: i32) -> (i32, i32, i32, i32) {
    %c1_i32 = arith.constant 1 : i32
    %0 = arith.muli %arg1, %c1_i32 : i32
    %1 = arith.addi %0, %arg2 : i32
    %c0_i32 = arith.constant 0 : i32
    %c0_i32_0 = arith.constant 0 : i32
    %c0_i32_1 = arith.constant 0 : i32
    return %arg0, %1, %c0_i32, %c0_i32_0 : i32, i32, i32, i32
  }
  func.func @transform_1(%arg0: i32, %arg1: i32, %arg2: i32) -> (i32, i32, i32, i32) {
    %c1_i32 = arith.constant 1 : i32
    %0 = arith.muli %arg1, %c1_i32 : i32
    %1 = arith.addi %0, %arg2 : i32
    %c0_i32 = arith.constant 0 : i32
    %c0_i32_0 = arith.constant 0 : i32
    %c0_i32_1 = arith.constant 0 : i32
    return %arg0, %1, %c0_i32, %c0_i32_0 : i32, i32, i32, i32
  }
  func.func @transform_2(%arg0: i32, %arg1: i32, %arg2: i32) -> (i32, i32, i32, i32) {
    %c1_i32 = arith.constant 1 : i32
    %0 = arith.muli %arg0, %c1_i32 : i32
    %1 = arith.addi %0, %arg1 : i32
    %c0_i32 = arith.constant 0 : i32
    %c0_i32_0 = arith.constant 0 : i32
    %c0_i32_1 = arith.constant 0 : i32
    %c0_i32_2 = arith.constant 0 : i32
    return %c0_i32, %1, %c0_i32_0, %c0_i32_1 : i32, i32, i32, i32
  }
}

</mosaic_0001>

<llo_original>
// kernel: bce_dice_loss.1
$region0: #{bce_dice_loss.1}
  #allocation0 [shape = 'u32[]', space=smem, size = 0x4, offset = 0x4, fixed_abs, tag = 'smem constant byte address 0x4 - core index']
  #allocation1 [shape = 'u32[144,128]{1,0:T(1,128)}', space=vmem, size = 0x12000, scoped, tag = 'internal scratch']
  %s0 = inlined_call_operand.vmem [shape: f32[2,1,8,128], index: 0, kind: input, shape index: {}]
  %s1 = inlined_call_operand.vmem [shape: f32[2,1,8,128], index: 1, kind: input, shape index: {}]
  %s2 = inlined_call_operand.vmem [shape: f32[4,2,8,128], index: 2, kind: output, shape index: {}]
  %s3 = sld [smem:[#allocation0]]
  $region22: #{bce_dice_loss.1} parent=0
    _
  %s5 = ssub.s32 1, %s3
  %s6 = scalar_select 0, %s5, %s3
  // Predicated region
  $region2: #{bce_dice_loss.1} parent=0 // pred_check
    _
  $region3: #{bce_dice_loss.1} parent=0 // pred_check_branch
    %8 = sbr.rel (0) target = $region5
  $region4: #{bce_dice_loss.1} parent=0 // pred_region
    %s9 = sadd.s32 0, 0
    %p10 = scmp.lt.s32.totalorder %s9, 0
    %s11 = scalar_select %p10, %s9, 0
    %s12 = smul.addr %s11, 8
    %s13 = scalar_lea.vmem %s0, %s12
    %s14 = sadd.s32 0, 0
  $region5: #{bce_dice_loss.1} parent=0 // pred_fallthru
    _
  // Predicated region
  $region6: #{bce_dice_loss.1} parent=0 // pred_check
    _
  $region7: #{bce_dice_loss.1} parent=0 // pred_check_branch
    %16 = sbr.rel (0) target = $region9
  $region8: #{bce_dice_loss.1} parent=0 // pred_region
    %s17 = sadd.s32 0, 0
    %p18 = scmp.lt.s32.totalorder %s17, 0
    %s19 = scalar_select %p18, %s17, 0
    %s20 = smul.addr %s19, 8
    %s21 = scalar_lea.vmem %s1, %s20
    %s22 = sadd.s32 0, 0
  $region9: #{bce_dice_loss.1} parent=0 // pred_fallthru
    _
  %s23 = sadd.s32 0, 0
  %p24 = scmp.lt.s32.totalorder %s23, 0
  %s25 = scalar_select %p24, %s23, 0
  %s26 = smul.addr %s25, 8
  %s27 = scalar_lea.vmem %s0, %s26
  %s28 = sadd.s32 0, 0
  %p29 = scmp.lt.s32.totalorder %s28, 0
  %s30 = scalar_select %p29, %s28, 0
  %s31 = smul.addr %s30, 8
  %s32 = scalar_lea.vmem %s1, %s31
  %s33 = sadd.s32 0, 0
  %s34 = smul.u32 2, %s33
  %p35 = scmp.lt.s32.totalorder %s34, 1
  %s36 = scalar_select %p35, %s34, 1
  %s37 = smul.addr %s36, 8
  %s38 = scalar_lea.vmem %s2, %s37
  %s39 = sadd.s32 0, 0
  %p40 = scmp.lt.s32.totalorder %s39, 0
  %s41 = scalar_select %p40, %s39, 0
  %s42 = smul.addr %s41, 8
  %s43 = scalar_lea.vmem %s0, %s42
  %s44 = sadd.s32 0, 0
  %s45 = sadd.s32 0, 0
  %p46 = scmp.lt.s32.totalorder %s45, 0
  %s47 = scalar_select %p46, %s45, 0
  %s48 = smul.addr %s47, 8
  %s49 = scalar_lea.vmem %s1, %s48
  %s50 = sadd.s32 0, 0
  %s51 = sadd.s32 0, 0
  %s52 = smul.u32 2, %s51
  %p53 = scmp.lt.s32.totalorder %s52, 1
  %s54 = scalar_select %p53, %s52, 1
  %s55 = smul.addr %s54, 8
  %s56 = scalar_lea.vmem %s2, %s55
  %s57 = sadd.s32 0, 0
  %s58 = smul.u32 2, %s57
  %p59 = scmp.eq.s32.totalorder 0, 0
  // Predicated region
  $region10: #{bce_dice_loss.1} parent=0 // pred_check
    %p60 = pneg %p59
  $region11: #{bce_dice_loss.1} parent=0 // pred_check_branch
    %62 = sbr.rel (%p60) target = $region13
  $region12: #{bce_dice_loss.1} parent=0 // pred_region
    %63 = vst [vmem:[%s56] sm:$0xff] 0.0
    %64 = vst [vmem:[%s56 + $0x8] sm:$0xff] 0.0
    %65 = vst [vmem:[%s56 + $0x10] sm:$0xff] 0.0
    %66 = vst [vmem:[%s56 + $0x18] sm:$0xff] 0.0
    %67 = vst [vmem:[%s56 + $0x20] sm:$0xff] 0.0
    %68 = vst [vmem:[%s56 + $0x28] sm:$0xff] 0.0
    %69 = vst [vmem:[%s56 + $0x30] sm:$0xff] 0.0
    %70 = vst [vmem:[%s56 + $0x38] sm:$0xff] 0.0
  $region13: #{bce_dice_loss.1} parent=0 // pred_fallthru
    _
  %v71 = vld [vmem:[%s43] sm:$0xff]
  %v72 = vld [vmem:[%s43 + $0x8] sm:$0xff]
  %v73 = vld [vmem:[%s49] sm:$0xff]
  %v74 = vld [vmem:[%s49 + $0x8] sm:$0xff]
  %v75 = vand.u32 2147483647, %v71
  %v76 = vand.u32 2147483647, %v72
  %v77 = vsub.f32 0.0, %v75
  %v78 = vsub.f32 0.0, %v76
  %v79 = vmul.f32 %v77, 1.442695
  %v80 = vpow.pop %v79
  %v81 = vmul.f32 %v78, 1.442695
  %v82 = vpow.pop %v81
  %v83 = vmax.f32 %v71, 0.0
  %v84 = vmax.f32 %v72, 0.0
  %v85 = vmul.f32 %v71, %v73
  %v86 = vmul.f32 %v72, %v74
  %v87 = vsub.f32 %v83, %v85
  %v88 = vsub.f32 %v84, %v86
  %v89 = vadd.f32 %v80, 1.0
  %v90 = vadd.f32 %v82, 1.0
  %v91 = vlog2.pop %v89
  %v92 = vmul.f32 %v91, 0.6931472
  %v93 = vlog2.pop %v90
  %v94 = vmul.f32 %v93, 0.6931472
  %v95 = vadd.f32 %v87, %v92
  %v96 = vadd.f32 %v88, %v94
  %v97 = vrcp.pop %v89
  %v98 = vmul.f32 1.0, %v97
  %v99 = vrcp.pop %v90
  %v100 = vmul.f32 1.0, %v99
  %vm101 = vcmp.ge.f32.partialorder %v71, 0.0
  %vm102 = vcmp.ge.f32.partialorder %v72, 0.0
  %v103 = vmul.f32 %v80, %v98
  %v104 = vmul.f32 %v82, %v100
  %v105 = vsel %vm101, %v98, %v103
  %v106 = vsel %vm102, %v100, %v104
  %v107 = vld [vmem:[%s56] sm:$0xff]
  %v108 = vld [vmem:[%s56 + $0x8] sm:$0xff]
  %v109 = vadd.f32 %v95, 0.0
  %v110 = vadd.f32 %v96, 0.0
  %v111 = vadd.f32 %v107, %v109
  %v112 = vadd.f32 %v108, %v110
  %113 = vst [vmem:[%s56] sm:$0xff] %v111
  %114 = vst [vmem:[%s56 + $0x8] sm:$0xff] %v112
  %s115 = scalar_lea.vmem %s56, 16
  %v116 = vld [vmem:[%s115] sm:$0xff]
  %v117 = vld [vmem:[%s115 + $0x8] sm:$0xff]
  %v118 = vmul.f32 %v105, %v73
  %v119 = vmul.f32 %v106, %v74
  %v120 = vadd.f32 %v118, 0.0
  %v121 = vadd.f32 %v119, 0.0
  %v122 = vadd.f32 %v116, %v120
  %v123 = vadd.f32 %v117, %v121
  %124 = vst [vmem:[%s115] sm:$0xff] %v122
  %125 = vst [vmem:[%s115 + $0x8] sm:$0xff] %v123
  %s126 = scalar_lea.vmem %s56, 32
  %v127 = vld [vmem:[%s126] sm:$0xff]
  %v128 = vld [vmem:[%s126 + $0x8] sm:$0xff]
  %v129 = vadd.f32 %v105, 0.0
  %v130 = vadd.f32 %v106, 0.0
  %v131 = vadd.f32 %v127, %v129
  %v132 = vadd.f32 %v128, %v130
  %133 = vst [vmem:[%s126] sm:$0xff] %v131
  %134 = vst [vmem:[%s126 + $0x8] sm:$0xff] %v132
  %s135 = scalar_lea.vmem %s56, 48
  %v136 = vld [vmem:[%s135] sm:$0xff]
  %v137 = vld [vmem:[%s135 + $0x8] sm:$0xff]
  %v138 = vadd.f32 %v73, 0.0
  %v139 = vadd.f32 %v74, 0.0
  %v140 = vadd.f32 %v136, %v138
  %v141 = vadd.f32 %v137, %v139
  %142 = vst [vmem:[%s135] sm:$0xff] %v140
  %143 = vst [vmem:[%s135 + $0x8] sm:$0xff] %v141
  %s144 = sadd.s32 0, 0
  %s145 = smul.u32 2, %s144
  %p146 = scmp.lt.s32.totalorder %s145, 1
  %s147 = scalar_select %p146, %s145, 1
  %s148 = smul.addr %s147, 8
  %s149 = scalar_lea.vmem %s2, %s148
  // Predicated region
  $region14: #{bce_dice_loss.1} parent=0 // pred_check
    _
  $region15: #{bce_dice_loss.1} parent=0 // pred_check_branch
    %151 = sbr.rel (0) target = $region17
  $region16: #{bce_dice_loss.1} parent=0 // pred_region
    %s152 = sadd.s32 0, 0
    %s153 = smul.u32 2, %s152
  $region17: #{bce_dice_loss.1} parent=0 // pred_fallthru
    _
  // Predicated region
  $region18: #{bce_dice_loss.1} parent=0 // pred_check
    _
  $region19: #{bce_dice_loss.1} parent=0 // pred_check_branch
    %155 = sbr.rel (0) target = $region21
  $region20: #{bce_dice_loss.1} parent=0 // pred_region
    %s156 = sadd.s32 0, 0
    %s157 = smul.u32 2, %s156
    %p158 = scmp.lt.s32.totalorder %s157, 1
    %s159 = scalar_select %p158, %s157, 1
    %s160 = smul.addr %s159, 8
    %s161 = scalar_lea.vmem %s2, %s160
  $region21: #{bce_dice_loss.1} parent=0 // pred_fallthru
    _

</llo_original>
